<compile_context>
chip_gen: v7x
topology: tpu7x:2x2x1
jax: 0.10.0
libtpu: 0.0.40
codegen_flags: <defaults>
</compile_context>

<pallas_src>
import jax
import jax.numpy as jnp
from jax.experimental import pallas as pl
from jax.experimental.pallas import tpu as pltpu


def _pass1_kernel(x_ref, w12_ref, bs_ref, vs_ref, s_ref, psum_ref):
    """One batch element: S = V_s @ sigmoid((x@W1) @ (x@W2^T)^T + b_s)."""
    C = x_ref.shape[-1]
    x = x_ref[0]                                       # (N, C) bf16

    # Fused projection: [lhs | rhs^T] = x @ [W1 | W2^T], f32 MXU accumulation.
    proj = jnp.dot(x, w12_ref[...],
                   preferred_element_type=jnp.float32)          # (N, 2C) f32
    lhs = proj[:, :C].astype(jnp.bfloat16)                      # (N, C)
    rhs_t = proj[:, C:].astype(jnp.bfloat16)                    # (N, C)

    # product[n, m] = sum_c lhs[n, c] * rhs_t[m, c] + b_s[n, m]
    # (MXU contracts the transposed RHS natively; no (C, N) intermediate.)
    product = jax.lax.dot_general(
        lhs, rhs_t, (((1,), (1,)), ((), ())),
        preferred_element_type=jnp.float32) + bs_ref[...]       # (N, N) f32

    sig = jax.nn.sigmoid(product).astype(jnp.bfloat16)          # (N, N) bf16
    s = jnp.dot(vs_ref[...], sig,
                preferred_element_type=jnp.float32)             # (N, N) f32

    s_ref[0] = s
    # Per-batch partial sum for the global normalizer (reduced across B in XLA).
    psum_ref[...] = jnp.sum(s).reshape(1, 1, 1)


def _pass2_kernel(total_ref, s_ref, out_ref):
    """out = exp(S - total); total is the global sum of S (SMEM scalar)."""
    total = total_ref[0]
    out_ref[...] = jnp.exp(s_ref[...] - total)


def _pass1_vmem_limit(B, N, C):
    bf16, f32 = 2, 4
    est = (2 * N * C * bf16            # x block, double-buffered
           + C * 2 * C * bf16          # resident fused weight [W1 | W2^T]
           + N * N * f32               # resident b_s
           + N * N * bf16              # resident V_s
           + 2 * (N * N + 1) * f32     # S + psum output blocks, double-buffered
           + 3 * N * N * f32           # product / sigmoid / S intermediates
           + N * 2 * C * f32)          # proj intermediate
    # generous headroom, never below the default scoped limits, and always
    # under v7x's 64 MiB physical VMEM.
    return int(min(max(4 * est, 32 * 2 ** 20), 48 * 2 ** 20))


def spatial_attention(x, w1, w2, b_s, v_s):
    B, N, C = x.shape
    # Tiny XLA-side prep: fuse the two projection weights (and pre-transpose
    # W2 so the kernel never builds the (B, C, N) intermediate), cast the MXU
    # operands to bf16, squeeze b_s to 2D.
    w12 = jnp.concatenate([w1, w2.T], axis=1).astype(jnp.bfloat16)   # (C, 2C)
    x_bf = x.astype(jnp.bfloat16)
    vs_bf = v_s.astype(jnp.bfloat16)
    bs2d = b_s.reshape(N, N).astype(jnp.float32)

    # ---- Pass 1: per-batch S and per-batch partial sums (batch-parallel). ----
    s, psum = pl.pallas_call(
        _pass1_kernel,
        grid=(B,),
        in_specs=[
            pl.BlockSpec((1, N, C), lambda b: (b, 0, 0)),    # x       (tiled)
            pl.BlockSpec((C, 2 * C), lambda b: (0, 0)),      # [W1|W2^T] resident
            pl.BlockSpec((N, N), lambda b: (0, 0)),          # b_s       resident
            pl.BlockSpec((N, N), lambda b: (0, 0)),          # V_s       resident
        ],
        out_specs=(
            pl.BlockSpec((1, N, N), lambda b: (b, 0, 0)),    # S
            pl.BlockSpec((1, 1, 1), lambda b: (b, 0, 0)),    # per-batch sum
        ),
        out_shape=(
            jax.ShapeDtypeStruct((B, N, N), jnp.float32),
            jax.ShapeDtypeStruct((B, 1, 1), jnp.float32),
        ),
        compiler_params=pltpu.CompilerParams(
            dimension_semantics=("parallel",),
            vmem_limit_bytes=_pass1_vmem_limit(B, N, C),
        ),
    )(x_bf, w12, bs2d, vs_bf)

    # Tiny XLA reduce over B partial sums -> global normalizer scalar.
    total = jnp.sum(psum).reshape(1).astype(jnp.float32)

    # ---- Pass 2: exp(S - total), written in place over S (aliased). ----
    out = pl.pallas_call(
        _pass2_kernel,
        grid=(B,),
        in_specs=[
            pl.BlockSpec(memory_space=pltpu.MemorySpace.SMEM),   # total scalar
            pl.BlockSpec((1, N, N), lambda b: (b, 0, 0)),        # S
        ],
        out_specs=pl.BlockSpec((1, N, N), lambda b: (b, 0, 0)),
        out_shape=jax.ShapeDtypeStruct((B, N, N), jnp.float32),
        input_output_aliases={1: 0},
        compiler_params=pltpu.CompilerParams(
            dimension_semantics=("parallel",)),
    )(total, s)
    return out


def reference(x, w1, w2, b_s, v_s):
    # Pure-JAX literal mirror of the PyTorch forward (f32, for checking).
    lhs = jnp.einsum('bnc,cd->bnd', x, w1)
    rhs = jnp.einsum('cd,bnd->bcn', w2, x)          # W2 @ x^T : (B, C, N)
    product = jnp.einsum('bnc,bcm->bnm', lhs, rhs) + b_s
    S = jnp.einsum('nk,bkm->bnm', v_s, jax.nn.sigmoid(product))
    total = jnp.sum(jnp.sum(S, axis=0))
    return jnp.exp(S) / jnp.exp(total)


if __name__ == "__main__":
    B, N, C = 2, 16, 64   # batch, num_vertices, hid_c

    key = jax.random.PRNGKey(0)
    kx, k1, k2, kb, kv = jax.random.split(key, 5)
    scale = 0.05
    x = jax.random.normal(kx, (B, N, C), jnp.float32) * scale
    w1 = jax.random.normal(k1, (C, C), jnp.float32) * scale
    w2 = jax.random.normal(k2, (C, C), jnp.float32) * scale
    b_s = jax.random.normal(kb, (1, N, N), jnp.float32) * scale
    v_s = jax.random.normal(kv, (N, N), jnp.float32) * 0.02  # keep |sum(S)| tame

    fwd = jax.jit(spatial_attention)
    out = jax.block_until_ready(fwd(x, w1, w2, b_s, v_s))

    ref = reference(x, w1, w2, b_s, v_s)
    assert out.shape == (B, N, N)
    rel_err = float(jnp.max(jnp.abs(out - ref)) / jnp.max(jnp.abs(ref)))
    # bf16 MXU operands with f32 accumulation -> a few-percent tolerance.
    assert rel_err < 5e-2, f"mismatch vs reference: rel_err={rel_err}"

    print("KERNEL_OK")
</pallas_src>

<mosaic_0001>
module attributes {stable_mosaic.version = 11 : i64} {
  func.func @_pass2_kernel(%arg0: i32, %arg1: memref<1xf32, #tpu.memory_space<smem>>, %arg2: memref<1x16x16xf32, #tpu.memory_space<vmem>>, %arg3: memref<1x16x16xf32, #tpu.memory_space<vmem>>) attributes {dimension_semantics = [#tpu.dimension_semantics<parallel>], iteration_bounds = array<i64: 2>, scalar_prefetch = 0 : i64, scratch_operands = 0 : i64, tpu.core_type = #tpu.core_type<tc>, window_params = [{transform_indices = @transform_0, window_bounds = array<i64: 1>}, {transform_indices = @transform_1, window_bounds = array<i64: 1, 16, 16>}, {transform_indices = @transform_2, window_bounds = array<i64: 1, 16, 16>}]} {
    %c0 = arith.constant 0 : index
    %0 = memref.load %arg1[%c0] : memref<1xf32, #tpu.memory_space<smem>>
    %c0_0 = arith.constant 0 : index
    %c0_1 = arith.constant 0 : index
    %c0_2 = arith.constant 0 : index
    %1 = vector.load %arg2[%c0_0, %c0_1, %c0_2] : memref<1x16x16xf32, #tpu.memory_space<vmem>>, vector<1x16x16xf32>
    %2 = vector.broadcast %0 : f32 to vector<1x16x16xf32>
    %3 = arith.subf %1, %2 : vector<1x16x16xf32>
    %4 = math.exp %3 : vector<1x16x16xf32>
    %c0_3 = arith.constant 0 : index
    %c0_4 = arith.constant 0 : index
    %c0_5 = arith.constant 0 : index
    %5 = vector.load %arg3[%c0_3, %c0_4, %c0_5] : memref<1x16x16xf32, #tpu.memory_space<vmem>>, vector<1x16x16xf32>
    tpu.vector_store %arg3[%c0_3, %c0_4, %c0_5], %4 {strides = array<i32>} : memref<1x16x16xf32, #tpu.memory_space<vmem>>, vector<1x16x16xf32>,
    return
  }
  func.func @transform_0(%arg0: i32) -> i32 {
    %c0_i32 = arith.constant 0 : i32
    %c0_i32_0 = arith.constant 0 : i32
    return %c0_i32 : i32
  }
  func.func @transform_1(%arg0: i32) -> (i32, i32, i32) {
    %c0_i32 = arith.constant 0 : i32
    %c0_i32_0 = arith.constant 0 : i32
    %c0_i32_1 = arith.constant 0 : i32
    return %arg0, %c0_i32, %c0_i32_0 : i32, i32, i32
  }
  func.func @transform_2(%arg0: i32) -> (i32, i32, i32) {
    %c0_i32 = arith.constant 0 : i32
    %c0_i32_0 = arith.constant 0 : i32
    %c0_i32_1 = arith.constant 0 : i32
    return %arg0, %c0_i32, %c0_i32_0 : i32, i32, i32
  }
}

module attributes {stable_mosaic.version = 11 : i64} {
  func.func @_pass1_kernel(%arg0: i32, %arg1: memref<1x16x64xbf16, #tpu.memory_space<vmem>>, %arg2: memref<64x128xbf16, #tpu.memory_space<vmem>>, %arg3: memref<16x16xf32, #tpu.memory_space<vmem>>, %arg4: memref<16x16xbf16, #tpu.memory_space<vmem>>, %arg5: memref<1x16x16xf32, #tpu.memory_space<vmem>>, %arg6: memref<1x1x1xf32, #tpu.memory_space<vmem>>) attributes {dimension_semantics = [#tpu.dimension_semantics<parallel>], iteration_bounds = array<i64: 2>, scalar_prefetch = 0 : i64, scratch_operands = 0 : i64, tpu.core_type = #tpu.core_type<tc>, window_params = [{transform_indices = @transform_0, window_bounds = array<i64: 1, 16, 64>}, {pipeline_mode = #tpu.pipeline_mode<synchronous>, transform_indices = @transform_1, window_bounds = array<i64: 64, 128>}, {pipeline_mode = #tpu.pipeline_mode<synchronous>, transform_indices = @transform_2, window_bounds = array<i64: 16, 16>}, {pipeline_mode = #tpu.pipeline_mode<synchronous>, transform_indices = @transform_3, window_bounds = array<i64: 16, 16>}, {transform_indices = @transform_4, window_bounds = array<i64: 1, 16, 16>}, {transform_indices = @transform_5, window_bounds = array<i64: 1, 1, 1>}]} {
    %c0 = arith.constant 0 : index
    %c0_0 = arith.constant 0 : index
    %c0_1 = arith.constant 0 : index
    %0 = vector.load %arg1[%c0, %c0_0, %c0_1] : memref<1x16x64xbf16, #tpu.memory_space<vmem>>, vector<1x16x64xbf16>
    %1 = vector.shape_cast %0 : vector<1x16x64xbf16> to vector<16x64xbf16>
    %c0_2 = arith.constant 0 : index
    %c0_3 = arith.constant 0 : index
    %2 = vector.load %arg2[%c0_2, %c0_3] : memref<64x128xbf16, #tpu.memory_space<vmem>>, vector<64x128xbf16>
    %cst = arith.constant dense<0.000000e+00> : vector<16x128xf32>
    %3 = tpu.matmul %1, %2, %cst {dimension_numbers = #tpu.dot_dimension_numbers<[1], [0], [0], [1], [0, 0, 1, 1], [], []>} : vector<16x64xbf16>, vector<64x128xbf16>, vector<16x128xf32> -> vector<16x128xf32>
    %4 = vector.extract_strided_slice %3 {offsets = [0, 0], sizes = [16, 64], strides = [1, 1]} : vector<16x128xf32> to vector<16x64xf32>
    %5 = arith.truncf %4 : vector<16x64xf32> to vector<16x64xbf16>
    %6 = vector.extract_strided_slice %3 {offsets = [0, 64], sizes = [16, 64], strides = [1, 1]} : vector<16x128xf32> to vector<16x64xf32>
    %7 = arith.truncf %6 : vector<16x64xf32> to vector<16x64xbf16>
    %cst_4 = arith.constant dense<0.000000e+00> : vector<16x16xf32>
    %8 = tpu.matmul %5, %7, %cst_4 {dimension_numbers = #tpu.dot_dimension_numbers<[1], [1], [0], [0], [0, 0, 1, 0], [], []>} : vector<16x64xbf16>, vector<16x64xbf16>, vector<16x16xf32> -> vector<16x16xf32>
    %c0_5 = arith.constant 0 : index
    %c0_6 = arith.constant 0 : index
    %9 = vector.load %arg3[%c0_5, %c0_6] : memref<16x16xf32, #tpu.memory_space<vmem>>, vector<16x16xf32>
    %10 = arith.addf %8, %9 : vector<16x16xf32>
    %11 = arith.negf %10 : vector<16x16xf32>
    %12 = math.exp %11 : vector<16x16xf32>
    %cst_7 = arith.constant 1.000000e+00 : f32
    %13 = vector.broadcast %cst_7 : f32 to vector<16x16xf32>
    %14 = arith.addf %13, %12 : vector<16x16xf32>
    %15 = arith.divf %13, %14 : vector<16x16xf32>
    %16 = arith.truncf %15 : vector<16x16xf32> to vector<16x16xbf16>
    %c0_8 = arith.constant 0 : index
    %c0_9 = arith.constant 0 : index
    %17 = vector.load %arg4[%c0_8, %c0_9] : memref<16x16xbf16, #tpu.memory_space<vmem>>, vector<16x16xbf16>
    %cst_10 = arith.constant dense<0.000000e+00> : vector<16x16xf32>
    %18 = tpu.matmul %17, %16, %cst_10 {dimension_numbers = #tpu.dot_dimension_numbers<[1], [0], [0], [1], [0, 0, 1, 1], [], []>} : vector<16x16xbf16>, vector<16x16xbf16>, vector<16x16xf32> -> vector<16x16xf32>
    %c0_11 = arith.constant 0 : index
    %c0_12 = arith.constant 0 : index
    %c0_13 = arith.constant 0 : index
    %19 = vector.load %arg5[%c0_11, %c0_12, %c0_13] : memref<1x16x16xf32, #tpu.memory_space<vmem>>, vector<1x16x16xf32>
    %20 = vector.shape_cast %19 : vector<1x16x16xf32> to vector<16x16xf32>
    %21 = vector.shape_cast %18 : vector<16x16xf32> to vector<1x16x16xf32>
    tpu.vector_store %arg5[%c0_11, %c0_12, %c0_13], %21 {strides = array<i32>} : memref<1x16x16xf32, #tpu.memory_space<vmem>>, vector<1x16x16xf32>,
    %22 = vector.shape_cast %18 : vector<16x16xf32> to vector<1x16x16xf32>
    %cst_14 = arith.constant dense<0.000000e+00> : vector<1xf32>
    %23 = vector.multi_reduction <add>, %22, %cst_14 [1, 2] : vector<1x16x16xf32> to vector<1xf32>
    %24 = vector.shape_cast %23 : vector<1xf32> to vector<1x1x1xf32>
    %25 = vector.extract %24[0, 0, 0] : f32 from vector<1x1x1xf32>
    %26 = vector.broadcast %25 : f32 to vector<1x1x1xf32>
    %c0_15 = arith.constant 0 : index
    %c0_16 = arith.constant 0 : index
    %c0_17 = arith.constant 0 : index
    %27 = vector.load %arg6[%c0_15, %c0_16, %c0_17] : memref<1x1x1xf32, #tpu.memory_space<vmem>>, vector<1x1x1xf32>
    tpu.vector_store %arg6[%c0_15, %c0_16, %c0_17], %26 {strides = array<i32>} : memref<1x1x1xf32, #tpu.memory_space<vmem>>, vector<1x1x1xf32>,
    return
  }
  func.func @transform_0(%arg0: i32) -> (i32, i32, i32) {
    %c0_i32 = arith.constant 0 : i32
    %c0_i32_0 = arith.constant 0 : i32
    %c0_i32_1 = arith.constant 0 : i32
    return %arg0, %c0_i32, %c0_i32_0 : i32, i32, i32
  }
  func.func @transform_1(%arg0: i32) -> (i32, i32) {
    %c0_i32 = arith.constant 0 : i32
    %c0_i32_0 = arith.constant 0 : i32
    %c0_i32_1 = arith.constant 0 : i32
    return %c0_i32, %c0_i32_0 : i32, i32
  }
  func.func @transform_2(%arg0: i32) -> (i32, i32) {
    %c0_i32 = arith.constant 0 : i32
    %c0_i32_0 = arith.constant 0 : i32
    %c0_i32_1 = arith.constant 0 : i32
    return %c0_i32, %c0_i32_0 : i32, i32
  }
  func.func @transform_3(%arg0: i32) -> (i32, i32) {
    %c0_i32 = arith.constant 0 : i32
    %c0_i32_0 = arith.constant 0 : i32
    %c0_i32_1 = arith.constant 0 : i32
    return %c0_i32, %c0_i32_0 : i32, i32
  }
  func.func @transform_4(%arg0: i32) -> (i32, i32, i32) {
    %c0_i32 = arith.constant 0 : i32
    %c0_i32_0 = arith.constant 0 : i32
    %c0_i32_1 = arith.constant 0 : i32
    return %arg0, %c0_i32, %c0_i32_0 : i32, i32, i32
  }
  func.func @transform_5(%arg0: i32) -> (i32, i32, i32) {
    %c0_i32 = arith.constant 0 : i32
    %c0_i32_0 = arith.constant 0 : i32
    %c0_i32_1 = arith.constant 0 : i32
    return %arg0, %c0_i32, %c0_i32_0 : i32, i32, i32
  }
}

</mosaic_0001>

<llo_original>
// kernel: spatial_attention.3
$region0: #{spatial_attention.3}
  #allocation0 [shape = 'u32[]', space=smem, size = 0x4, offset = 0x4, fixed_abs, tag = 'smem constant byte address 0x4 - core index']
  #allocation1 [shape = 'u32[144,128]{1,0:T(1,128)}', space=vmem, size = 0x12000, scoped, tag = 'internal scratch']
  #allocation2 [shape = 'f32[1]{0:T(128)S(6)}', space=smem, size = 0x200, scoped, tag = 'scoped memory for spatial_attention.3']
  %s0 = inlined_call_operand.<no memory space> [shape: f32[1], index: 0, kind: input, shape index: {}]
  %s1 = inlined_call_operand.hbm [shape: f32[2,16,16], index: 1, kind: input, shape index: {}, may-alias: {1,2}]
  %s2 = inlined_call_operand.hbm [shape: f32[2,16,16], index: 2, kind: output, shape index: {}, may-alias: {1,2}]
  %s3 = sld [smem:[#allocation0]]
  $region45: #{spatial_attention.3} parent=0
    _
  %s5 = ssub.s32 1, %s3
  %s6 = scalar_select 0, %s5, %s3
  %7 = sst [smem:[#allocation2]] %s0
  $region1: #{spatial_attention.3} parent=0
    #allocation3 [shape = 'u8[16384]{0}', space=vmem, size = 0x4000, scoped, tag = 'input window, operand 1']
    #allocation4 [shape = 's32[2]{0}', space=sflag, size = 0x8, scoped, tag = 'scoped memory for spatial_attention.3']
    #allocation5 [shape = 's32[2]{0}', space=sflag, size = 0x8, scoped, tag = 'scoped memory for spatial_attention.3']
    #allocation6 [shape = 'u8[16384]{0}', space=vmem, size = 0x4000, scoped, tag = 'output window, operand 0']
    %8 = vsyncpa [#allocation4], 0
    %s9 = scalar_lea.sflag [#allocation4], 1
    %10 = vsyncpa %s9, 0
    %11 = vsyncpa [#allocation5], 0
    %s12 = scalar_lea.sflag [#allocation5], 1
    %13 = vsyncpa %s12, 0
    loop: start=0, step=1, limit=4
    $region2: #{spatial_attention.3} parent=1 // loop_pre_header
      _
    $region3: #{spatial_attention.3} parent=1 // loop_header
      %s15 = sphi 0, %s19
      %p16 = scmp.ge.s32.totalorder %s15, 4
      %s23 = sphi 0, %s23
      %s25 = sphi 0, %s23
      %s26 = sphi 0, %s25
      %s40 = sphi 0, %s26
      %s46 = sphi 0, %s48
      %s49 = sphi 0, %s46
      %s50 = sphi 0, %s49
      %s66 = sphi 0, %s50
      %s72 = sphi 0, %s74
      %s75 = sphi 0, %s72
      %s76 = sphi 0, %s75
      %s92 = sphi 0, %s76
    $region4: #{spatial_attention.3} parent=1 // loop_header_branch
      %18 = sbr.rel (%p16) target = $region8
    $region5: #{spatial_attention.3} parent=1 // loop_body
      %s20 = ssub.s32 %s15, 1
      %s21 = ssub.s32 %s15, 2
      %s22 = sadd.s32 %s15, 1
      %s24 = sadd.s32 %s23, 1
      %p27 = scmp.eq.s32.totalorder %s15, 1
      %p28 = scmp.ne.s32.totalorder %s23, %s25
      %p29 = scmp.eq.s32.totalorder %s15, 0
      %p30 = por %p28, %p29
      %p31 = scmp.ne.s32.totalorder %s23, %s25
      %p32 = scmp.eq.s32.totalorder %s20, 1
      %p33 = por %p31, %p32
      %p34 = scmp.ne.s32.totalorder %s25, %s26
      %p35 = scmp.eq.s32.totalorder %s20, 0
      %p36 = por %p34, %p35
      %p37 = scmp.ne.s32.totalorder %s25, %s26
      %p38 = scmp.eq.s32.totalorder %s21, 1
      %p39 = por %p37, %p38
      %p41 = scmp.ne.s32.totalorder %s26, %s40
      %p42 = scmp.eq.s32.totalorder %s21, 0
      %p43 = por %p41, %p42
      %s44 = ssub.s32 %s15, %s22
      %p45 = scmp.eq.s32.totalorder %s44, 0
      %s47 = sadd.s32 %s46, 1
      %s48 = scalar_select %p45, %s46, %s47
      %p51 = pneg %p45
      %p52 = scmp.eq.s32.totalorder %s15, 1
      %p53 = por %p51, %p52
      %p54 = scmp.ne.s32.totalorder %s46, %s49
      %p55 = scmp.eq.s32.totalorder %s15, 0
      %p56 = por %p54, %p55
      %p57 = scmp.ne.s32.totalorder %s46, %s49
      %p58 = scmp.eq.s32.totalorder %s20, 1
      %p59 = por %p57, %p58
      %p60 = scmp.ne.s32.totalorder %s49, %s50
      %p61 = scmp.eq.s32.totalorder %s20, 0
      %p62 = por %p60, %p61
      %p63 = scmp.ne.s32.totalorder %s49, %s50
      %p64 = scmp.eq.s32.totalorder %s21, 1
      %p65 = por %p63, %p64
      %p67 = scmp.ne.s32.totalorder %s50, %s66
      %p68 = scmp.eq.s32.totalorder %s21, 0
      %p69 = por %p67, %p68
      %s70 = ssub.s32 %s15, %s22
      %p71 = scmp.eq.s32.totalorder %s70, 0
      %s73 = sadd.s32 %s72, 1
      %s74 = scalar_select %p71, %s72, %s73
      %p77 = pneg %p71
      %p78 = scmp.eq.s32.totalorder %s15, 1
      %p79 = por %p77, %p78
      %p80 = scmp.ne.s32.totalorder %s72, %s75
      %p81 = scmp.eq.s32.totalorder %s15, 0
      %p82 = por %p80, %p81
      %p83 = scmp.ne.s32.totalorder %s72, %s75
      %p84 = scmp.eq.s32.totalorder %s20, 1
      %p85 = por %p83, %p84
      %p86 = scmp.ne.s32.totalorder %s75, %s76
      %p87 = scmp.eq.s32.totalorder %s20, 0
      %p88 = por %p86, %p87
      %p89 = scmp.ne.s32.totalorder %s75, %s76
      %p90 = scmp.eq.s32.totalorder %s21, 1
      %p91 = por %p89, %p90
      %p93 = scmp.ne.s32.totalorder %s76, %s92
      %p94 = scmp.eq.s32.totalorder %s21, 0
      %p95 = por %p93, %p94
      %p96 = scmp.le.s32.totalorder 1, %s15
      %p97 = scmp.lt.s32.totalorder %s15, 3
      %p98 = pnand %p96, %p97
      %p99 = pneg %p98
      // Predicated region
      $region9: #{spatial_attention.3} parent=5 // pred_check
        _
      $region10: #{spatial_attention.3} parent=5 // pred_check_branch
        %101 = sbr.rel (%p98) target = $region12
      $region11: #{spatial_attention.3} parent=5 // pred_region
        %s102 = ssub.s32 %s15, 1
        // Predicated region
        $region13: #{spatial_attention.3} parent=11 // pred_check
          %p103 = pneg %p36
        $region14: #{spatial_attention.3} parent=11 // pred_check_branch
          %105 = sbr.rel (%p103) target = $region16
        $region15: #{spatial_attention.3} parent=11 // pred_region
          _
        $region16: #{spatial_attention.3} parent=11 // pred_fallthru
          _
      $region12: #{spatial_attention.3} parent=5 // pred_fallthru
        _
      %p106 = scmp.lt.s32.totalorder %s15, 2
      // Predicated region
      $region17: #{spatial_attention.3} parent=5 // pred_check
        %p107 = pneg %p106
      $region18: #{spatial_attention.3} parent=5 // pred_check_branch
        %109 = sbr.rel (%p107) target = $region20
      $region19: #{spatial_attention.3} parent=5 // pred_region
        // Predicated region
        $region21: #{spatial_attention.3} parent=19 // pred_check
          %p110 = pneg %p56
        $region22: #{spatial_attention.3} parent=19 // pred_check_branch
          %112 = sbr.rel (%p110) target = $region24
        $region23: #{spatial_attention.3} parent=19 // pred_region
          %s113 = sand.u32 %s46, 1
          %s114 = scalar_lea.sflag [#allocation4], %s113
          %s115 = sand.u32 %s46, 1
          %s116 = smul.addr %s115, 16
          %s117 = scalar_lea.vmem [#allocation3], %s116
          %s119 = ssub.s32 256, 256
          %120 = vsyncadd %s114, %s119
          %s121 = smul.addr %s15, 2
          %s122 = smul.addr %s121, 128
          %s123 = scalar_lea.hbm %s1, %s122
          %s124 = sshll.u32 %s117, 4
          %s125 = int_to_ptr.vmem [resolvable:$true] %s124
          %130 = dma.hbm_to_vmem [thread:$0]  %s123, 256, %s125, %s114, 128, 128, 8
        $region24: #{spatial_attention.3} parent=19 // pred_fallthru
          _
      $region20: #{spatial_attention.3} parent=5 // pred_fallthru
        _
      %p131 = scmp.le.s32.totalorder 1, %s15
      %p132 = scmp.lt.s32.totalorder %s15, 3
      %p133 = pnand %p131, %p132
      %p134 = pneg %p133
      // Predicated region
      $region25: #{spatial_attention.3} parent=5 // pred_check
        _
      $region26: #{spatial_attention.3} parent=5 // pred_check_branch
        %136 = sbr.rel (%p133) target = $region28
      $region27: #{spatial_attention.3} parent=5 // pred_region
        %s137 = ssub.s32 %s15, 1
        %s138 = sand.u32 %s49, 1
        %s139 = scalar_lea.sflag [#allocation4], %s138
        %s140 = sand.u32 %s49, 1
        %s141 = smul.addr %s140, 16
        %s142 = scalar_lea.vmem [#allocation3], %s141
        // Predicated region
        $region29: #{spatial_attention.3} parent=27 // pred_check
          %p143 = pneg %p62
        $region30: #{spatial_attention.3} parent=27 // pred_check_branch
          %145 = sbr.rel (%p143) target = $region32
        $region31: #{spatial_attention.3} parent=27 // pred_region
          %146 = dma.done %s139, 256
        $region32: #{spatial_attention.3} parent=27 // pred_fallthru
          _
        %p147 = pneg %p36
        %p148 = pneg %p33
        %s149 = sand.u32 %s49, 1
        %s150 = scalar_lea.sflag [#allocation4], %s149
        %s151 = sand.u32 %s49, 1
        %s152 = smul.addr %s151, 16
        %s153 = scalar_lea.vmem [#allocation3], %s152
        %p154 = pneg %p62
        %p155 = pneg %p59
        %p156 = pneg %p88
        %p157 = pneg %p85
        %s158 = sand.u32 %s75, 1
        %s159 = scalar_lea.sflag [#allocation5], %s158
        %s160 = sand.u32 %s75, 1
        %s161 = smul.addr %s160, 16
        %s162 = scalar_lea.vmem [#allocation6], %s161
        %s163 = sld [smem:[#allocation2]]
        %v164 = vld [vmem:[%s142] sm:$0xff]
        %v165 = vld [vmem:[%s142 + $0x8] sm:$0xff]
        %v166 = vstv %s163
        %v167 = vsub.f32 %v164, %v166
        %v168 = vsub.f32 %v165, %v166
        %v169 = vmul.f32 %v167, 1.442695
        %v170 = vpow.pop %v169
        %v171 = vmul.f32 %v168, 1.442695
        %v172 = vpow.pop %v171
        %vm173 = vcmask 130048
        %174 = vst.msk [vmem:[%s162] sm:$0xff] %vm173, %v170
        %175 = vst.msk [vmem:[%s162 + $0x8] sm:$0xff] %vm173, %v172
        %s176 = sand.u32 %s75, 1
        %s177 = scalar_lea.sflag [#allocation5], %s176
        %s178 = sand.u32 %s75, 1
        %s179 = smul.addr %s178, 16
        %s180 = scalar_lea.vmem [#allocation6], %s179
        // Predicated region
        $region33: #{spatial_attention.3} parent=27 // pred_check
          %p181 = pneg %p85
        $region34: #{spatial_attention.3} parent=27 // pred_check_branch
          %183 = sbr.rel (%p181) target = $region36
        $region35: #{spatial_attention.3} parent=27 // pred_region
          %s185 = ssub.s32 256, 256
          %186 = vsyncadd %s177, %s185
          %s187 = smul.addr %s20, 2
          %s188 = smul.addr %s187, 128
          %s189 = scalar_lea.hbm %s2, %s188
          %s190 = sshll.u32 %s180, 4
          %s191 = int_to_ptr.vmem [resolvable:$true] %s190
          %196 = dma.vmem_to_hbm [thread:$0]  %s191, 256, %s189, %s177, 128, 128, 8
        $region36: #{spatial_attention.3} parent=27 // pred_fallthru
          _
      $region28: #{spatial_attention.3} parent=5 // pred_fallthru
        _
      %p197 = scmp.le.s32.totalorder 2, %s15
      // Predicated region
      $region37: #{spatial_attention.3} parent=5 // pred_check
        %p198 = pneg %p197
      $region38: #{spatial_attention.3} parent=5 // pred_check_branch
        %200 = sbr.rel (%p198) target = $region40
      $region39: #{spatial_attention.3} parent=5 // pred_region
        %s201 = ssub.s32 %s15, 2
        // Predicated region
        $region41: #{spatial_attention.3} parent=39 // pred_check
          %p202 = pneg %p91
        $region42: #{spatial_attention.3} parent=39 // pred_check_branch
          %204 = sbr.rel (%p202) target = $region44
        $region43: #{spatial_attention.3} parent=39 // pred_region
          %s205 = sand.u32 %s76, 1
          %s206 = scalar_lea.sflag [#allocation5], %s205
          %s207 = sand.u32 %s76, 1
          %s208 = smul.addr %s207, 16
          %s209 = scalar_lea.vmem [#allocation6], %s208
          %210 = dma.done %s206, 256
        $region44: #{spatial_attention.3} parent=39 // pred_fallthru
          _
      $region40: #{spatial_attention.3} parent=5 // pred_fallthru
        _
    $region6: #{spatial_attention.3} parent=1 // loop_footer
      %s19 = sadd.s32 1, %s15
    $region7: #{spatial_attention.3} parent=1 // loop_footer_branch
      %14 = sbr.rel target = $region3
    $region8: #{spatial_attention.3} parent=1 // loop_exit
      _
    %211 = vsyncpa [#allocation4], 1
    %s212 = scalar_lea.sflag [#allocation4], 1
    %213 = vsyncpa %s212, 1
    %214 = vsyncpa [#allocation5], 1
    %s215 = scalar_lea.sflag [#allocation5], 1
    %216 = vsyncpa %s215, 1

// kernel: spatial_attention.2
$region0: #{spatial_attention.2}
  #allocation0 [shape = 'u32[]', space=smem, size = 0x4, offset = 0x4, fixed_abs, tag = 'smem constant byte address 0x4 - core index']
  #allocation1 [shape = 'u32[144,128]{1,0:T(1,128)}', space=vmem, size = 0x12000, scoped, tag = 'internal scratch']
  %s0 = inlined_call_operand.vmem [shape: bf16[2,16,64], index: 0, kind: input, shape index: {}]
  %s1 = inlined_call_operand.vmem [shape: bf16[64,128], index: 1, kind: input, shape index: {}]
  %s2 = inlined_call_operand.vmem [shape: f32[16,16], index: 2, kind: input, shape index: {}]
  %s3 = inlined_call_operand.vmem [shape: bf16[16,16], index: 3, kind: input, shape index: {}]
  %s4 = inlined_call_operand.hbm [shape: f32[2,16,16], index: 4, kind: output, shape index: {0}]
  %s5 = inlined_call_operand.vmem [shape: f32[2,1,1], index: 5, kind: output, shape index: {1}]
  %6 = xla_tuple %s4, %s5
  %s7 = sld [smem:[#allocation0]]
  $region57: #{spatial_attention.2} parent=0
    _
  %s9 = ssub.s32 1, %s7
  %s10 = scalar_select 0, %s9, %s7
  $region1: #{spatial_attention.2} parent=0
    #allocation2 [shape = 'u8[16384]{0}', space=vmem, size = 0x4000, scoped, tag = 'output window, operand 0']
    #allocation3 [shape = 's32[2]{0}', space=sflag, size = 0x8, scoped, tag = 'scoped memory for spatial_attention.2']
    %11 = vsyncpa [#allocation3], 0
    %s12 = scalar_lea.sflag [#allocation3], 1
    %13 = vsyncpa %s12, 0
    loop: start=0, step=1, limit=4
    $region2: #{spatial_attention.2} parent=1 // loop_pre_header
      _
    $region3: #{spatial_attention.2} parent=1 // loop_header
      %s15 = sphi 0, %s19
      %p16 = scmp.ge.s32.totalorder %s15, 4
      %s25 = sphi 0, %s27
      %s28 = sphi 0, %s25
      %s29 = sphi 0, %s28
      %s45 = sphi 0, %s29
      %s49 = sphi 0, %s49
      %s51 = sphi 0, %s49
      %s52 = sphi 0, %s51
      %s66 = sphi 0, %s52
      %s70 = sphi 0, %s70
      %s72 = sphi 0, %s70
      %s73 = sphi 0, %s72
      %s87 = sphi 0, %s73
      %s91 = sphi 0, %s91
      %s93 = sphi 0, %s91
      %s94 = sphi 0, %s93
      %s108 = sphi 0, %s94
      %s114 = sphi 0, %s116
      %s117 = sphi 0, %s114
      %s118 = sphi 0, %s117
      %s134 = sphi 0, %s118
      %s140 = sphi 0, %s142
      %s143 = sphi 0, %s140
      %s144 = sphi 0, %s143
      %s160 = sphi 0, %s144
    $region4: #{spatial_attention.2} parent=1 // loop_header_branch
      %18 = sbr.rel (%p16) target = $region8
    $region5: #{spatial_attention.2} parent=1 // loop_body
      %s20 = ssub.s32 %s15, 1
      %s21 = ssub.s32 %s15, 2
      %s22 = sadd.s32 %s15, 1
      %s23 = ssub.s32 %s15, %s22
      %p24 = scmp.eq.s32.totalorder %s23, 0
      %s26 = sadd.s32 %s25, 1
      %s27 = scalar_select %p24, %s25, %s26
      %p30 = pneg %p24
      %p31 = scmp.eq.s32.totalorder %s15, 1
      %p32 = por %p30, %p31
      %p33 = scmp.ne.s32.totalorder %s25, %s28
      %p34 = scmp.eq.s32.totalorder %s15, 0
      %p35 = por %p33, %p34
      %p36 = scmp.ne.s32.totalorder %s25, %s28
      %p37 = scmp.eq.s32.totalorder %s20, 1
      %p38 = por %p36, %p37
      %p39 = scmp.ne.s32.totalorder %s28, %s29
      %p40 = scmp.eq.s32.totalorder %s20, 0
      %p41 = por %p39, %p40
      %p42 = scmp.ne.s32.totalorder %s28, %s29
      %p43 = scmp.eq.s32.totalorder %s21, 1
      %p44 = por %p42, %p43
      %p46 = scmp.ne.s32.totalorder %s29, %s45
      %p47 = scmp.eq.s32.totalorder %s21, 0
      %p48 = por %p46, %p47
      %s50 = sadd.s32 %s49, 1
      %p53 = scmp.eq.s32.totalorder %s15, 1
      %p54 = scmp.ne.s32.totalorder %s49, %s51
      %p55 = scmp.eq.s32.totalorder %s15, 0
      %p56 = por %p54, %p55
      %p57 = scmp.ne.s32.totalorder %s49, %s51
      %p58 = scmp.eq.s32.totalorder %s20, 1
      %p59 = por %p57, %p58
      %p60 = scmp.ne.s32.totalorder %s51, %s52
      %p61 = scmp.eq.s32.totalorder %s20, 0
      %p62 = por %p60, %p61
      %p63 = scmp.ne.s32.totalorder %s51, %s52
      %p64 = scmp.eq.s32.totalorder %s21, 1
      %p65 = por %p63, %p64
      %p67 = scmp.ne.s32.totalorder %s52, %s66
      %p68 = scmp.eq.s32.totalorder %s21, 0
      %p69 = por %p67, %p68
      %s71 = sadd.s32 %s70, 1
      %p74 = scmp.eq.s32.totalorder %s15, 1
      %p75 = scmp.ne.s32.totalorder %s70, %s72
      %p76 = scmp.eq.s32.totalorder %s15, 0
      %p77 = por %p75, %p76
      %p78 = scmp.ne.s32.totalorder %s70, %s72
      %p79 = scmp.eq.s32.totalorder %s20, 1
      %p80 = por %p78, %p79
      %p81 = scmp.ne.s32.totalorder %s72, %s73
      %p82 = scmp.eq.s32.totalorder %s20, 0
      %p83 = por %p81, %p82
      %p84 = scmp.ne.s32.totalorder %s72, %s73
      %p85 = scmp.eq.s32.totalorder %s21, 1
      %p86 = por %p84, %p85
      %p88 = scmp.ne.s32.totalorder %s73, %s87
      %p89 = scmp.eq.s32.totalorder %s21, 0
      %p90 = por %p88, %p89
      %s92 = sadd.s32 %s91, 1
      %p95 = scmp.eq.s32.totalorder %s15, 1
      %p96 = scmp.ne.s32.totalorder %s91, %s93
      %p97 = scmp.eq.s32.totalorder %s15, 0
      %p98 = por %p96, %p97
      %p99 = scmp.ne.s32.totalorder %s91, %s93
      %p100 = scmp.eq.s32.totalorder %s20, 1
      %p101 = por %p99, %p100
      %p102 = scmp.ne.s32.totalorder %s93, %s94
      %p103 = scmp.eq.s32.totalorder %s20, 0
      %p104 = por %p102, %p103
      %p105 = scmp.ne.s32.totalorder %s93, %s94
      %p106 = scmp.eq.s32.totalorder %s21, 1
      %p107 = por %p105, %p106
      %p109 = scmp.ne.s32.totalorder %s94, %s108
      %p110 = scmp.eq.s32.totalorder %s21, 0
      %p111 = por %p109, %p110
      %s112 = ssub.s32 %s15, %s22
      %p113 = scmp.eq.s32.totalorder %s112, 0
      %s115 = sadd.s32 %s114, 1
      %s116 = scalar_select %p113, %s114, %s115
      %p119 = pneg %p113
      %p120 = scmp.eq.s32.totalorder %s15, 1
      %p121 = por %p119, %p120
      %p122 = scmp.ne.s32.totalorder %s114, %s117
      %p123 = scmp.eq.s32.totalorder %s15, 0
      %p124 = por %p122, %p123
      %p125 = scmp.ne.s32.totalorder %s114, %s117
      %p126 = scmp.eq.s32.totalorder %s20, 1
      %p127 = por %p125, %p126
      %p128 = scmp.ne.s32.totalorder %s117, %s118
      %p129 = scmp.eq.s32.totalorder %s20, 0
      %p130 = por %p128, %p129
      %p131 = scmp.ne.s32.totalorder %s117, %s118
      %p132 = scmp.eq.s32.totalorder %s21, 1
      %p133 = por %p131, %p132
      %p135 = scmp.ne.s32.totalorder %s118, %s134
      %p136 = scmp.eq.s32.totalorder %s21, 0
      %p137 = por %p135, %p136
      %s138 = ssub.s32 %s15, %s22
      %p139 = scmp.eq.s32.totalorder %s138, 0
      %s141 = sadd.s32 %s140, 1
      %s142 = scalar_select %p139, %s140, %s141
      %p145 = pneg %p139
      %p146 = scmp.eq.s32.totalorder %s15, 1
      %p147 = por %p145, %p146
      %p148 = scmp.ne.s32.totalorder %s140, %s143
      %p149 = scmp.eq.s32.totalorder %s15, 0
      %p150 = por %p148, %p149
      %p151 = scmp.ne.s32.totalorder %s140, %s143
      %p152 = scmp.eq.s32.totalorder %s20, 1
      %p153 = por %p151, %p152
      %p154 = scmp.ne.s32.totalorder %s143, %s144
      %p155 = scmp.eq.s32.totalorder %s20, 0
      %p156 = por %p154, %p155
      %p157 = scmp.ne.s32.totalorder %s143, %s144
      %p158 = scmp.eq.s32.totalorder %s21, 1
      %p159 = por %p157, %p158
      %p161 = scmp.ne.s32.totalorder %s144, %s160
      %p162 = scmp.eq.s32.totalorder %s21, 0
      %p163 = por %p161, %p162
      %p164 = scmp.le.s32.totalorder 1, %s15
      %p165 = scmp.lt.s32.totalorder %s15, 3
      %p166 = pnand %p164, %p165
      %p167 = pneg %p166
      // Predicated region
      $region9: #{spatial_attention.2} parent=5 // pred_check
        _
      $region10: #{spatial_attention.2} parent=5 // pred_check_branch
        %169 = sbr.rel (%p166) target = $region12
      $region11: #{spatial_attention.2} parent=5 // pred_region
        %s170 = ssub.s32 %s15, 1
        // Predicated region
        $region13: #{spatial_attention.2} parent=11 // pred_check
          %p171 = pneg %p62
        $region14: #{spatial_attention.2} parent=11 // pred_check_branch
          %173 = sbr.rel (%p171) target = $region16
        $region15: #{spatial_attention.2} parent=11 // pred_region
          _
        $region16: #{spatial_attention.2} parent=11 // pred_fallthru
          _
        // Predicated region
        $region17: #{spatial_attention.2} parent=11 // pred_check
          %p174 = pneg %p83
        $region18: #{spatial_attention.2} parent=11 // pred_check_branch
          %176 = sbr.rel (%p174) target = $region20
        $region19: #{spatial_attention.2} parent=11 // pred_region
          _
        $region20: #{spatial_attention.2} parent=11 // pred_fallthru
          _
        // Predicated region
        $region21: #{spatial_attention.2} parent=11 // pred_check
          %p177 = pneg %p104
        $region22: #{spatial_attention.2} parent=11 // pred_check_branch
          %179 = sbr.rel (%p177) target = $region24
        $region23: #{spatial_attention.2} parent=11 // pred_region
          _
        $region24: #{spatial_attention.2} parent=11 // pred_fallthru
          _
      $region12: #{spatial_attention.2} parent=5 // pred_fallthru
        _
      %p180 = scmp.lt.s32.totalorder %s15, 2
      // Predicated region
      $region25: #{spatial_attention.2} parent=5 // pred_check
        %p181 = pneg %p180
      $region26: #{spatial_attention.2} parent=5 // pred_check_branch
        %183 = sbr.rel (%p181) target = $region28
      $region27: #{spatial_attention.2} parent=5 // pred_region
        // Predicated region
        $region29: #{spatial_attention.2} parent=27 // pred_check
          %p184 = pneg %p35
        $region30: #{spatial_attention.2} parent=27 // pred_check_branch
          %186 = sbr.rel (%p184) target = $region32
        $region31: #{spatial_attention.2} parent=27 // pred_region
          %p187 = scmp.lt.s32.totalorder %s15, 1
          %s188 = scalar_select %p187, %s15, 1
          %s189 = smul.addr %s188, 2
          %s190 = smul.addr %s189, 4
          %s191 = scalar_lea.vmem %s0, %s190
        $region32: #{spatial_attention.2} parent=27 // pred_fallthru
          _
      $region28: #{spatial_attention.2} parent=5 // pred_fallthru
        _
      %p192 = scmp.le.s32.totalorder 1, %s15
      %p193 = scmp.lt.s32.totalorder %s15, 3
      %p194 = pnand %p192, %p193
      %p195 = pneg %p194
      // Predicated region
      $region33: #{spatial_attention.2} parent=5 // pred_check
        _
      $region34: #{spatial_attention.2} parent=5 // pred_check_branch
        %197 = sbr.rel (%p194) target = $region36
      $region35: #{spatial_attention.2} parent=5 // pred_region
        %s198 = ssub.s32 %s15, 1
        %p199 = scmp.lt.s32.totalorder %s20, 1
        %s200 = scalar_select %p199, %s20, 1
        %s201 = smul.addr %s200, 2
        %s202 = smul.addr %s201, 4
        %s203 = scalar_lea.vmem %s0, %s202
        %p204 = pneg %p41
        %p205 = pneg %p38
        %p206 = pneg %p62
        %p207 = pneg %p59
        %p208 = pneg %p83
        %p209 = pneg %p80
        %p210 = pneg %p104
        %p211 = pneg %p101
        %p212 = pneg %p130
        %p213 = pneg %p127
        %s214 = sand.u32 %s117, 1
        %s215 = scalar_lea.sflag [#allocation3], %s214
        %s216 = sand.u32 %s117, 1
        %s217 = smul.addr %s216, 16
        %s218 = scalar_lea.vmem [#allocation2], %s217
        %p219 = pneg %p156
        %p220 = pneg %p153
        %p221 = scmp.lt.s32.totalorder %s20, 1
        %s222 = scalar_select %p221, %s20, 1
        %s223 = scalar_lea.vmem %s5, %s222
        %p224 = scmp.lt.s32.totalorder %s20, 1
        %s225 = scalar_select %p224, %s20, 1
        %s226 = smul.addr %s225, 2
        %s227 = smul.addr %s226, 4
        %s228 = scalar_lea.vmem %s0, %s227
        %p229 = scmp.lt.s32.totalorder %s20, 1
        %s230 = scalar_select %p229, %s20, 1
        %s231 = scalar_lea.vmem %s5, %s230
        %v233 = vld [vmem:[%s228] sm:$0xf]
        %v234 = vld [vmem:[%s228 + $0x4] sm:$0xf]
        %v235 = vld [vmem:[%s1] sm:$0xf]
        %v236 = vld [vmem:[%s1 + $0x4] sm:$0xf]
        %v237 = vld [vmem:[%s1 + $0x8] sm:$0xf]
        %v238 = vld [vmem:[%s1 + $0xc] sm:$0xf]
        %v239 = vld [vmem:[%s1 + $0x10] sm:$0xf]
        %v240 = vld [vmem:[%s1 + $0x14] sm:$0xf]
        %v241 = vld [vmem:[%s1 + $0x18] sm:$0xf]
        %v242 = vld [vmem:[%s1 + $0x1c] sm:$0xf]
        %v245 = vunpack.c.l.b16 %v233
        %v246 = vunpack.c.l.b16 %v234
        %v247 = vpack.c.b16 %v246, %v245
        %v256 = vunpack.c.l.b16 %v235
        %v257 = vunpack.c.l.b16 %v236
        %v258 = vunpack.c.l.b16 %v237
        %v259 = vunpack.c.l.b16 %v238
        %v260 = vunpack.c.l.b16 %v239
        %v261 = vunpack.c.l.b16 %v240
        %v262 = vunpack.c.l.b16 %v241
        %v263 = vunpack.c.l.b16 %v242
        %v264 = vpack.c.b16 %v257, %v256
        %v265 = vpack.c.b16 %v259, %v258
        %v266 = vpack.c.b16 %v261, %v260
        %v267 = vpack.c.b16 %v263, %v262
        %vm272 = vcmask 523264
        %v274 = vsel %vm272, %v247, 0
        %276 = vmatprep.subr.bf16.mxu0 0
        %277 = vmatpush1.bf16.msra.mxu0 %v264
        %278 = vmatprep.subr.bf16.mxu0 0
        %279 = vmatpush1.bf16.msra.mxu0 %v265
        %280 = vmatprep.subr.bf16.mxu0 0
        %281 = vmatpush1.bf16.msra.mxu0 %v266
        %282 = vmatprep.subr.bf16.mxu0 0
        %283 = vmatpush1.bf16.msra.mxu0 %v267
        %284 = vmatprep.subr.bf16.mxu0 0
        %285 = vmatpush1.bf16.msra.mxu0 0
        %286 = vmatprep.subr.bf16.mxu0 0
        %287 = vmatpush1.bf16.msra.mxu0 0
        %288 = vmatprep.subr.bf16.mxu0 0
        %289 = vmatpush1.bf16.msra.mxu0 0
        %290 = vmatprep.subr.bf16.mxu0 0
        %291 = vmatpush1.bf16.msra.mxu0 0
        %292 = vmatprep.subr.bf16.mxu0 0
        %293 = vmatpush1.bf16.msra.mxu0 0
        %294 = vmatprep.subr.bf16.mxu0 0
        %295 = vmatpush1.bf16.msra.mxu0 0
        %296 = vmatprep.subr.bf16.mxu0 0
        %297 = vmatpush1.bf16.msra.mxu0 0
        %298 = vmatprep.subr.bf16.mxu0 0
        %299 = vmatpush1.bf16.msra.mxu0 0
        %300 = vmatprep.subr.bf16.mxu0 0
        %301 = vmatpush1.bf16.msra.mxu0 0
        %302 = vmatprep.subr.bf16.mxu0 0
        %303 = vmatpush1.bf16.msra.mxu0 0
        %304 = vmatprep.subr.bf16.mxu0 0
        %305 = vmatpush1.bf16.msra.mxu0 0
        %306 = vmatprep.subr.bf16.mxu0 0
        %307 = vmatpush1.bf16.msra.mxu0 0
        %308 = vmatprep.mubr.bf16.mxu0 0
        %309 = vmatmul.mubr.bf16.gmra.mrb[0].mxu0 %v274
        %v310 = vpop.f32.mrb[0].mxu0
        %v311 = vadd.f32 0.0, %v310
        %v312 = vpop.f32.mrb[0].mxu0
        %v313 = vpop.f32.mrb[0].mxu0
        %v314 = vadd.f32 0.0, %v313
        %v315 = vpop.f32.mrb[0].mxu0
        %316 = vdwg.mxu0
        %v317 = vpack.c.bf16 %v314, %v311
        %v318 = vld [vmem:[%s2] sm:$0xff]
        %v319 = vld [vmem:[%s2 + $0x8] sm:$0xff]
        %321 = vrot.lane.b32.xlu0 %v317, 64
        %v322 = vpop.permute.xlu0 %321
        %v324 = vsel %vm272, %v317, 0
        %v327 = vsel %vm272, %v322, 0
        %329 = vmatprep.subr.bf16.mxu0 0
        %330 = vmatpush1.bf16.xpose.msra.mxu0 %v327
        %331 = vmatprep.subr.bf16.mxu0 0
        %332 = vmatpush1.bf16.xpose.msra.mxu0 0
        %333 = vmatprep.subr.bf16.mxu0 0
        %334 = vmatpush1.bf16.xpose.msra.mxu0 0
        %335 = vmatprep.subr.bf16.mxu0 0
        %336 = vmatpush1.bf16.xpose.msra.mxu0 0
        %337 = vmatprep.subr.bf16.mxu0 0
        %338 = vmatpush1.bf16.xpose.msra.mxu0 0
        %339 = vmatprep.subr.bf16.mxu0 0
        %340 = vmatpush1.bf16.xpose.msra.mxu0 0
        %341 = vmatprep.subr.bf16.mxu0 0
        %342 = vmatpush1.bf16.xpose.msra.mxu0 0
        %343 = vmatprep.subr.bf16.mxu0 0
        %344 = vmatpush1.bf16.xpose.msra.mxu0 0
        %345 = vmatprep.subr.bf16.mxu0 0
        %346 = vmatpush1.bf16.xpose.msra.mxu0 0
        %347 = vmatprep.subr.bf16.mxu0 0
        %348 = vmatpush1.bf16.xpose.msra.mxu0 0
        %349 = vmatprep.subr.bf16.mxu0 0
        %350 = vmatpush1.bf16.xpose.msra.mxu0 0
        %351 = vmatprep.subr.bf16.mxu0 0
        %352 = vmatpush1.bf16.xpose.msra.mxu0 0
        %353 = vmatprep.subr.bf16.mxu0 0
        %354 = vmatpush1.bf16.xpose.msra.mxu0 0
        %355 = vmatprep.subr.bf16.mxu0 0
        %356 = vmatpush1.bf16.xpose.msra.mxu0 0
        %357 = vmatprep.subr.bf16.mxu0 0
        %358 = vmatpush1.bf16.xpose.msra.mxu0 0
        %359 = vmatprep.subr.bf16.mxu0 0
        %360 = vmatpush1.bf16.xpose.msra.mxu0 0
        %361 = vmatprep.mubr.bf16.mxu0 0
        %362 = vmatmul.mubr.bf16.gmra.mrb[0].mxu0 %v324
        %v363 = vpop.f32.mrb[0].mxu0
        %v364 = vadd.f32 %v318, %v363
        %v365 = vpop.f32.mrb[0].mxu0
        %v366 = vpop.f32.mrb[0].mxu0
        %v367 = vadd.f32 %v319, %v366
        %v368 = vpop.f32.mrb[0].mxu0
        %369 = vdwg.mxu0
        %v370 = vxor.u32 %v364, 2147483648
        %v371 = vxor.u32 %v367, 2147483648
        %v372 = vmul.f32 %v370, 1.442695
        %v373 = vpow.pop %v372
        %v374 = vmul.f32 %v371, 1.442695
        %v375 = vpow.pop %v374
        %v376 = vadd.f32 %v373, 1.0
        %v377 = vadd.f32 %v375, 1.0
        %v378 = vrcp.pop %v376
        %v379 = vmul.f32 1.0, %v378
        %v380 = vrcp.pop %v377
        %v381 = vmul.f32 1.0, %v380
        %v382 = vpack.c.bf16 %v381, %v379
        %v383 = vld [vmem:[%s3] sm:$0xf]
        %v384 = vld [vmem:[%s3 + $0x4] sm:$0xf]
        %v387 = vunpack.c.l.b16 %v383
        %v388 = vunpack.c.l.b16 %v384
        %v389 = vpack.c.b16 %v388, %v387
        %vm390 = vcmask 130048
        %v392 = vsel %vm390, %v389, 0
        %394 = vmatprep.subr.bf16.mxu0 0
        %395 = vmatpush1.bf16.msra.mxu0 %v382
        %396 = vmatprep.subr.bf16.mxu0 0
        %397 = vmatpush1.bf16.msra.mxu0 0
        %398 = vmatprep.subr.bf16.mxu0 0
        %399 = vmatpush1.bf16.msra.mxu0 0
        %400 = vmatprep.subr.bf16.mxu0 0
        %401 = vmatpush1.bf16.msra.mxu0 0
        %402 = vmatprep.subr.bf16.mxu0 0
        %403 = vmatpush1.bf16.msra.mxu0 0
        %404 = vmatprep.subr.bf16.mxu0 0
        %405 = vmatpush1.bf16.msra.mxu0 0
        %406 = vmatprep.subr.bf16.mxu0 0
        %407 = vmatpush1.bf16.msra.mxu0 0
        %408 = vmatprep.subr.bf16.mxu0 0
        %409 = vmatpush1.bf16.msra.mxu0 0
        %410 = vmatprep.subr.bf16.mxu0 0
        %411 = vmatpush1.bf16.msra.mxu0 0
        %412 = vmatprep.subr.bf16.mxu0 0
        %413 = vmatpush1.bf16.msra.mxu0 0
        %414 = vmatprep.subr.bf16.mxu0 0
        %415 = vmatpush1.bf16.msra.mxu0 0
        %416 = vmatprep.subr.bf16.mxu0 0
        %417 = vmatpush1.bf16.msra.mxu0 0
        %418 = vmatprep.subr.bf16.mxu0 0
        %419 = vmatpush1.bf16.msra.mxu0 0
        %420 = vmatprep.subr.bf16.mxu0 0
        %421 = vmatpush1.bf16.msra.mxu0 0
        %422 = vmatprep.subr.bf16.mxu0 0
        %423 = vmatpush1.bf16.msra.mxu0 0
        %424 = vmatprep.subr.bf16.mxu0 0
        %425 = vmatpush1.bf16.msra.mxu0 0
        %426 = vmatprep.mubr.bf16.mxu0 0
        %427 = vmatmul.mubr.bf16.gmra.mrb[0].mxu0 %v392
        %v428 = vpop.f32.mrb[0].mxu0
        %v429 = vadd.f32 0.0, %v428
        %v430 = vpop.f32.mrb[0].mxu0
        %v431 = vpop.f32.mrb[0].mxu0
        %v432 = vadd.f32 0.0, %v431
        %v433 = vpop.f32.mrb[0].mxu0
        %434 = vdwg.mxu0
        %435 = vst.msk [vmem:[%s218] sm:$0xff] %vm390, %v429
        %436 = vst.msk [vmem:[%s218 + $0x8] sm:$0xff] %vm390, %v432
        %v437 = vsel %vm390, %v429, 0.0
        %v438 = vsel %vm390, %v432, 0.0
        %v439 = vadd.f32 %v437, %v438
        %440 = vadd.xlane.f32.xlu0 %v439
        %v441 = vpop.xlane.xlu0 %440
        %v442 = vrot.slane %v441, 4
        %v443 = vadd.f32 %v441, %v442
        %v444 = vrot.slane %v443, 2
        %v445 = vadd.f32 %v443, %v444
        %v446 = vrot.slane %v445, 1
        %v447 = vadd.f32 %v445, %v446
        %s448 = vtos %v447
        %v449 = vstv %s448
        %vm450 = vcmask 0
        %451 = vst.msk [vmem:[%s231] sm:$0x1] %vm450, %v449
        %s452 = sand.u32 %s117, 1
        %s453 = scalar_lea.sflag [#allocation3], %s452
        %s454 = sand.u32 %s117, 1
        %s455 = smul.addr %s454, 16
        %s456 = scalar_lea.vmem [#allocation2], %s455
        %p457 = scmp.lt.s32.totalorder %s20, 1
        %s458 = scalar_select %p457, %s20, 1
        %s459 = scalar_lea.vmem %s5, %s458
        // Predicated region
        $region37: #{spatial_attention.2} parent=35 // pred_check
          %p460 = pneg %p127
        $region38: #{spatial_attention.2} parent=35 // pred_check_branch
          %462 = sbr.rel (%p460) target = $region40
        $region39: #{spatial_attention.2} parent=35 // pred_region
          %s464 = ssub.s32 256, 256
          %465 = vsyncadd %s453, %s464
          %s466 = smul.addr %s20, 2
          %s467 = smul.addr %s466, 128
          %s468 = scalar_lea.hbm %s4, %s467
          %s469 = sshll.u32 %s456, 4
          %s470 = int_to_ptr.vmem [resolvable:$true] %s469
          %475 = dma.vmem_to_hbm [thread:$0]  %s470, 256, %s468, %s453, 128, 128, 8
        $region40: #{spatial_attention.2} parent=35 // pred_fallthru
          _
        // Predicated region
        $region41: #{spatial_attention.2} parent=35 // pred_check
          %p476 = pneg %p153
        $region42: #{spatial_attention.2} parent=35 // pred_check_branch
          %478 = sbr.rel (%p476) target = $region44
        $region43: #{spatial_attention.2} parent=35 // pred_region
          _
        $region44: #{spatial_attention.2} parent=35 // pred_fallthru
          _
      $region36: #{spatial_attention.2} parent=5 // pred_fallthru
        _
      %p479 = scmp.le.s32.totalorder 2, %s15
      // Predicated region
      $region45: #{spatial_attention.2} parent=5 // pred_check
        %p480 = pneg %p479
      $region46: #{spatial_attention.2} parent=5 // pred_check_branch
        %482 = sbr.rel (%p480) target = $region48
      $region47: #{spatial_attention.2} parent=5 // pred_region
        %s483 = ssub.s32 %s15, 2
        // Predicated region
        $region49: #{spatial_attention.2} parent=47 // pred_check
          %p484 = pneg %p133
        $region50: #{spatial_attention.2} parent=47 // pred_check_branch
          %486 = sbr.rel (%p484) target = $region52
        $region51: #{spatial_attention.2} parent=47 // pred_region
          %s487 = sand.u32 %s118, 1
          %s488 = scalar_lea.sflag [#allocation3], %s487
          %s489 = sand.u32 %s118, 1
          %s490 = smul.addr %s489, 16
          %s491 = scalar_lea.vmem [#allocation2], %s490
          %492 = dma.done %s488, 256
        $region52: #{spatial_attention.2} parent=47 // pred_fallthru
          _
        // Predicated region
        $region53: #{spatial_attention.2} parent=47 // pred_check
          %p493 = pneg %p159
        $region54: #{spatial_attention.2} parent=47 // pred_check_branch
          %495 = sbr.rel (%p493) target = $region56
        $region55: #{spatial_attention.2} parent=47 // pred_region
          %p496 = scmp.lt.s32.totalorder %s21, 1
          %s497 = scalar_select %p496, %s21, 1
          %s498 = scalar_lea.vmem %s5, %s497
        $region56: #{spatial_attention.2} parent=47 // pred_fallthru
          _
      $region48: #{spatial_attention.2} parent=5 // pred_fallthru
        _
    $region6: #{spatial_attention.2} parent=1 // loop_footer
      %s19 = sadd.s32 1, %s15
    $region7: #{spatial_attention.2} parent=1 // loop_footer_branch
      %14 = sbr.rel target = $region3
    $region8: #{spatial_attention.2} parent=1 // loop_exit
      _
    %499 = vsyncpa [#allocation3], 1
    %s500 = scalar_lea.sflag [#allocation3], 1
    %501 = vsyncpa %s500, 1

</llo_original>
